<compile_context>
chip_gen: v5e
topology: v5e:2x2
jax: 0.10.0
libtpu: 0.0.40
codegen_flags: <defaults>
</compile_context>

<pallas_src>
import functools
import math

import jax
import jax.numpy as jnp
from jax import lax
from jax.experimental import pallas as pl
from jax.experimental.pallas import tpu as pltpu


def _round_up(v, m):
    return (v + m - 1) // m * m


# --------------------------------------------------------------- kernels ---

def _row_l2_normalize_kernel(a_ref, o_ref):
    a = a_ref[...].astype(jnp.float32)
    # torch.nn.functional.normalize: v / max(||v||, 1e-12)
    #   == v * rsqrt(max(||v||^2, 1e-24))   (rsqrt goes to the EUP slot)
    inv = lax.rsqrt(jnp.maximum(jnp.sum(a * a, axis=-1, keepdims=True), 1e-24))
    o_ref[...] = (a * inv).astype(o_ref.dtype)


def _circle_margin_kernel(tgt_ref, xn_ref, wn_ref, out_ref, cos_ref,
                          *, margin, gamma, tn):
    # (TM, D) . (TN, D) contracted on last dims -> (TM, TN); no transpose.
    cosine = lax.dot_general(
        xn_ref[...], wn_ref[...],
        dimension_numbers=(((1,), (1,)), ((), ())),
        preferred_element_type=jnp.float32)

    g = jnp.float32(gamma)
    cos_ref[...] = cosine * g

    m2 = jnp.float32(margin * margin)
    col0 = pl.program_id(1) * tn                              # C-tile origin
    cls_ids = lax.broadcasted_iota(jnp.int32, cosine.shape, 1) + col0
    is_tgt = cls_ids == tgt_ref[...]                          # (TM, TN) bool

    neg = cosine * cosine - m2
    pos = m2 - (1.0 - cosine) ** 2
    out_ref[...] = jnp.where(is_tgt, pos, neg) * g


def _cosine_only_kernel(xn_ref, wn_ref, cos_ref, *, gamma):
    cosine = lax.dot_general(
        xn_ref[...], wn_ref[...],
        dimension_numbers=(((1,), (1,)), ((), ())),
        preferred_element_type=jnp.float32)
    cos_ref[...] = cosine * jnp.float32(gamma)


# -------------------------------------------------------------- wrappers ---

def _l2_normalize_rows(a, block_rows, out_dtype):
    rows, d = a.shape
    return pl.pallas_call(
        _row_l2_normalize_kernel,
        out_shape=jax.ShapeDtypeStruct((rows, d), out_dtype),
        grid_spec=pltpu.PrefetchScalarGridSpec(
            num_scalar_prefetch=0,
            grid=(rows // block_rows,),
            in_specs=[pl.BlockSpec((block_rows, d), lambda i: (i, 0))],
            out_specs=pl.BlockSpec((block_rows, d), lambda i: (i, 0)),
        ),
        compiler_params=pltpu.CompilerParams(
            dimension_semantics=("parallel",)),
    )(a)


def circle_margin_forward(x, weight, target=None, *, s=256.0, m=0.25,
                          tm_max=256, tn_max=512):
    """Pallas implementation of CircleMargin.forward.

    x:      (B, D) float
    weight: (C, D) float
    target: (B,) int class labels or None
    Returns (output, cosine*gamma) if target is given, else cosine*gamma.
    """
    B, D = x.shape
    C, D2 = weight.shape
    assert D == D2

    # bf16 MXU operands when both inputs are bf16 (fast path on v5e/v6e/v7x),
    # f32 accumulation either way.
    compute_dtype = (jnp.bfloat16
                     if (x.dtype == jnp.bfloat16 and weight.dtype == jnp.bfloat16)
                     else jnp.float32)

    # Tile sizes and lane/sublane-dense padded shapes.
    tm = min(tm_max, _round_up(B, 8))          # multiple of 8 (sublane)
    tn = min(tn_max, _round_up(C, 128))        # multiple of 128 (lane-dense out)
    b_pad = _round_up(B, tm)
    c_pad = _round_up(C, tn)
    d_pad = _round_up(D, 128)

    xp = jnp.pad(x.astype(compute_dtype), ((0, b_pad - B), (0, d_pad - D)))
    wp = jnp.pad(weight.astype(compute_dtype), ((0, c_pad - C), (0, d_pad - D)))

    # Normalize rows once (W normalization hoisted out of the B-tile loop).
    xn = _l2_normalize_rows(xp, tm, compute_dtype)
    wn = _l2_normalize_rows(wp, tn, compute_dtype)

    grid = (b_pad // tm, c_pad // tn)
    cost = pl.CostEstimate(
        flops=2 * b_pad * c_pad * d_pad,
        transcendentals=b_pad + c_pad,
        bytes_accessed=(b_pad * d_pad + c_pad * d_pad + 2 * b_pad * c_pad) * 4,
    )
    cparams = pltpu.CompilerParams(
        dimension_semantics=("parallel", "parallel"))

    if target is None:
        # Inference path: single output, no one-hot / margin math at all.
        cos = pl.pallas_call(
            functools.partial(_cosine_only_kernel, gamma=float(s)),
            out_shape=jax.ShapeDtypeStruct((b_pad, c_pad), jnp.float32),
            grid_spec=pltpu.PrefetchScalarGridSpec(
                num_scalar_prefetch=0,
                grid=grid,
                in_specs=[
                    pl.BlockSpec((tm, d_pad), lambda i, j: (i, 0)),
                    pl.BlockSpec((tn, d_pad), lambda i, j: (j, 0)),
                ],
                out_specs=pl.BlockSpec((tm, tn), lambda i, j: (i, j)),
            ),
            compiler_params=cparams,
            cost_estimate=cost,
        )(xn, wn)
        return cos[:B, :C]

    tgt = jnp.pad(target.astype(jnp.int32).reshape(B, 1),
                  ((0, b_pad - B), (0, 0)), constant_values=-1)

    out, cos = pl.pallas_call(
        functools.partial(_circle_margin_kernel,
                          margin=float(m), gamma=float(s), tn=tn),
        out_shape=(
            jax.ShapeDtypeStruct((b_pad, c_pad), jnp.float32),
            jax.ShapeDtypeStruct((b_pad, c_pad), jnp.float32),
        ),
        grid_spec=pltpu.PrefetchScalarGridSpec(
            num_scalar_prefetch=0,
            grid=grid,
            in_specs=[
                pl.BlockSpec((tm, 1), lambda i, j: (i, 0)),      # target (B-tile)
                pl.BlockSpec((tm, d_pad), lambda i, j: (i, 0)),  # normalized x
                pl.BlockSpec((tn, d_pad), lambda i, j: (j, 0)),  # normalized W
            ],
            out_specs=[
                pl.BlockSpec((tm, tn), lambda i, j: (i, j)),
                pl.BlockSpec((tm, tn), lambda i, j: (i, j)),
            ],
        ),
        compiler_params=cparams,
        cost_estimate=cost,
    )(tgt, xn, wn)
    return out[:B, :C], cos[:B, :C]


def _xavier_uniform(key, out_features, in_features):
    # torch.nn.init.xavier_uniform_ on a (out, in) matrix
    bound = math.sqrt(6.0 / (in_features + out_features))
    return jax.random.uniform(
        key, (out_features, in_features), dtype=jnp.float32,
        minval=-bound, maxval=bound)


if __name__ == "__main__":
    key = jax.random.PRNGKey(0)
    k_x, k_w, k_t = jax.random.split(key, 3)

    B, in_features, out_features = 8, 32, 16
    s, m = 256.0, 0.25

    x = jax.random.normal(k_x, (B, in_features), dtype=jnp.float32)
    weight = _xavier_uniform(k_w, out_features, in_features)
    target = jax.random.randint(k_t, (B,), 0, out_features, dtype=jnp.int32)

    # With target: (output, cosine * gamma)
    output, cos_scaled = circle_margin_forward(x, weight, target, s=s, m=m)
    output = jax.block_until_ready(output)
    cos_scaled = jax.block_until_ready(cos_scaled)

    # Without target: cosine * gamma only (single-output kernel)
    cos_only = jax.block_until_ready(circle_margin_forward(x, weight, None, s=s, m=m))

    # Sanity check vs pure-JAX reference
    xn_ref = x / jnp.maximum(jnp.linalg.norm(x, axis=-1, keepdims=True), 1e-12)
    wn_ref = weight / jnp.maximum(jnp.linalg.norm(weight, axis=-1, keepdims=True), 1e-12)
    cos_ref = xn_ref @ wn_ref.T
    one_hot = jax.nn.one_hot(target, out_features, dtype=jnp.float32)
    out_ref = (one_hot * (m ** 2 - (1 - cos_ref) ** 2)
               + (1.0 - one_hot) * (cos_ref ** 2 - m ** 2)) * s
    assert jnp.allclose(cos_scaled, cos_ref * s, atol=1e-3, rtol=1e-3)
    assert jnp.allclose(cos_only, cos_ref * s, atol=1e-3, rtol=1e-3)
    assert jnp.allclose(output, out_ref, atol=1e-3, rtol=1e-3)

    print("KERNEL_OK")
</pallas_src>

<mosaic_0001>
module attributes {stable_mosaic.version = 11 : i64} {
  func.func @_row_l2_normalize_kernel(%arg0: i32, %arg1: memref<8x128xf32, #tpu.memory_space<vmem>>, %arg2: memref<8x128xf32, #tpu.memory_space<vmem>>) attributes {dimension_semantics = [#tpu.dimension_semantics<parallel>], iteration_bounds = array<i64: 1>, scalar_prefetch = 0 : i64, scratch_operands = 0 : i64, tpu.core_type = #tpu.core_type<tc>, window_params = [{transform_indices = @transform_0, window_bounds = array<i64: 8, 128>}, {transform_indices = @transform_1, window_bounds = array<i64: 8, 128>}]} {
    %c0 = arith.constant 0 : index
    %c0_0 = arith.constant 0 : index
    %0 = vector.load %arg1[%c0, %c0_0] : memref<8x128xf32, #tpu.memory_space<vmem>>, vector<8x128xf32>
    %1 = arith.mulf %0, %0 : vector<8x128xf32>
    %cst = arith.constant dense<0.000000e+00> : vector<8xf32>
    %2 = vector.multi_reduction <add>, %1, %cst [1] : vector<8x128xf32> to vector<8xf32>
    %3 = vector.shape_cast %2 : vector<8xf32> to vector<8x1xf32>
    %cst_1 = arith.constant 1.000000e-24 : f32
    %4 = vector.broadcast %cst_1 : f32 to vector<8x1xf32>
    %5 = arith.maximumf %3, %4 : vector<8x1xf32>
    %6 = math.rsqrt %5 : vector<8x1xf32>
    %7 = vector.broadcast %6 : vector<8x1xf32> to vector<8x128xf32>
    %8 = arith.mulf %0, %7 : vector<8x128xf32>
    %c0_2 = arith.constant 0 : index
    %c0_3 = arith.constant 0 : index
    %9 = vector.load %arg2[%c0_2, %c0_3] : memref<8x128xf32, #tpu.memory_space<vmem>>, vector<8x128xf32>
    tpu.vector_store %arg2[%c0_2, %c0_3], %8 {strides = array<i32>} : memref<8x128xf32, #tpu.memory_space<vmem>>, vector<8x128xf32>,
    return
  }
  func.func @transform_0(%arg0: i32) -> (i32, i32) {
    %c0_i32 = arith.constant 0 : i32
    %c0_i32_0 = arith.constant 0 : i32
    return %arg0, %c0_i32 : i32, i32
  }
  func.func @transform_1(%arg0: i32) -> (i32, i32) {
    %c0_i32 = arith.constant 0 : i32
    %c0_i32_0 = arith.constant 0 : i32
    return %arg0, %c0_i32 : i32, i32
  }
}

</mosaic_0001>

<llo_original>
// kernel: tpu_custom_call.1
$region0: #{tpu_custom_call.1}
  #allocation0 [shape = 'u32[]', space=smem, size = 0x4, offset = 0x4, fixed_abs, tag = 'smem constant byte address 0x4 - core index']
  #allocation1 [shape = 'u32[72,128]{1,0:T(1,128)}', space=vmem, size = 0x9000, scoped, tag = 'internal scratch']
  %s0 = inlined_call_operand.hbm [shape: f32[8,128], index: 0, kind: input, shape index: {}]
  %s1 = inlined_call_operand.hbm [shape: f32[8,128], index: 1, kind: output, shape index: {}]
  %s2 = sld [smem:[#allocation0]]
  $region18: #{tpu_custom_call.1} parent=0
    _
  %s4 = ssub.s32 1, %s2
  %s5 = scalar_select 0, %s4, %s2
  $region1: #{tpu_custom_call.1} parent=0
    #allocation2 [shape = 'u8[4096]{0}', space=vmem, size = 0x1000, scoped, tag = 'input window, operand 0, single buffered']
    #allocation3 [shape = 's32[1]{0}', space=sflag, size = 0x4, scoped, tag = 'scoped memory for tpu_custom_call.1']
    #allocation4 [shape = 's32[1]{0}', space=sflag, size = 0x4, scoped, tag = 'scoped memory for tpu_custom_call.1']
    #allocation5 [shape = 'u8[4096]{0}', space=vmem, size = 0x1000, scoped, tag = 'output window, operand 0, single buffered']
    %6 = vsyncpa [#allocation3], 0
    %7 = vsyncpa [#allocation4], 0
    // Predicated region
    $region2: #{tpu_custom_call.1} parent=1 // pred_check
      _
    $region3: #{tpu_custom_call.1} parent=1 // pred_check_branch
      %9 = sbr.rel (0) target = $region5
    $region4: #{tpu_custom_call.1} parent=1 // pred_region
      %11 = vsyncadd [#allocation3], 0
      %s13 = sshll.u32 %s0, 4
      %s14 = int_to_ptr.hbm [resolvable:$true] %s13
      %s15 = sshll.u32 [#allocation2], 4
      %s16 = int_to_ptr.vmem [resolvable:$true] %s15
      %18 = dma.hbm_to_vmem [thread:$0]  %s14, 128, %s16, [#allocation3]
    $region5: #{tpu_custom_call.1} parent=1 // pred_fallthru
      _
    // Predicated region
    $region6: #{tpu_custom_call.1} parent=1 // pred_check
      _
    $region7: #{tpu_custom_call.1} parent=1 // pred_check_branch
      %20 = sbr.rel (0) target = $region9
    $region8: #{tpu_custom_call.1} parent=1 // pred_region
      %22 = dma.done [#allocation3], 128
    $region9: #{tpu_custom_call.1} parent=1 // pred_fallthru
      _
    %v23 = vld [vmem:[#allocation2] sm:$0xff]
    %v24 = vmul.f32 %v23, %v23
    %25 = vadd.xlane.f32.xlu0 %v24
    %v26 = vpop.xlane.xlu0 %25
    %v27 = vmax.f32 %v26, 1e-24
    %v28 = vrsqrt.pop %v27
    %v29 = vmul.f32 %v28, %v27
    %v30 = vmul.f32 %v29, %v28
    %v31 = vmul.f32 0.5, %v30
    %v32 = vsub.f32 1.5, %v31
    %v33 = vmul.f32 %v28, %v32
    %vm34 = vweird.f32 %v27
    %vm35 = vweird.f32 %v28
    %vm36 = vmor %vm34, %vm35
    %v37 = vsel %vm36, %v28, %v33
    %v38 = vmul.f32 %v23, %v37
    %39 = vst [vmem:[#allocation5] sm:$0xff] %v38
    // Predicated region
    $region10: #{tpu_custom_call.1} parent=1 // pred_check
      _
    $region11: #{tpu_custom_call.1} parent=1 // pred_check_branch
      %41 = sbr.rel (0) target = $region13
    $region12: #{tpu_custom_call.1} parent=1 // pred_region
      %43 = vsyncadd [#allocation4], 0
      %s45 = sshll.u32 [#allocation5], 4
      %s46 = int_to_ptr.vmem [resolvable:$true] %s45
      %s47 = sshll.u32 %s1, 4
      %s48 = int_to_ptr.hbm [resolvable:$true] %s47
      %50 = dma.vmem_to_hbm [thread:$0]  %s46, 128, %s48, [#allocation4]
    $region13: #{tpu_custom_call.1} parent=1 // pred_fallthru
      _
    // Predicated region
    $region14: #{tpu_custom_call.1} parent=1 // pred_check
      _
    $region15: #{tpu_custom_call.1} parent=1 // pred_check_branch
      %52 = sbr.rel (0) target = $region17
    $region16: #{tpu_custom_call.1} parent=1 // pred_region
      %54 = dma.done [#allocation4], 128
    $region17: #{tpu_custom_call.1} parent=1 // pred_fallthru
      _
    %55 = vsyncpa [#allocation3], 1
    %56 = vsyncpa [#allocation4], 1

</llo_original>
